<compile_context>
chip_gen: v5e
topology: v5e:2x2
jax: 0.10.0
libtpu: 0.0.40
codegen_flags: <defaults>
</compile_context>

<pallas_src>
import jax
import jax.numpy as jnp
from jax.experimental import pallas as pl
from jax.experimental.pallas import tpu as pltpu

EPS = 1e-5
K = 7      # conv kernel size
PAD = 3    # conv padding


def _sigmoid(t):
    return 1.0 / (1.0 + jnp.exp(-t))


# --------------------------------------------------------------- kernel 1 --
def stats_kernel(x_ref, s1_ref, s2_ref):
    """Per-channel sum and sum-of-squares; resident accumulator over the inner
    ("arbitrary") grid axis, one partial per leading ("parallel") axis index so
    both v7x TensorCores traverse half of x each."""
    @pl.when(pl.program_id(1) == 0)
    def _():
        s1_ref[...] = jnp.zeros_like(s1_ref)
        s2_ref[...] = jnp.zeros_like(s2_ref)

    x = x_ref[0]                                             # (C, H*W)
    s1_ref[0] += jnp.sum(x, axis=1, keepdims=True)           # (C, 1)
    s2_ref[0] += jnp.sum(x * x, axis=1, keepdims=True)       # (C, 1)


# --------------------------------------------------------------- kernel 2 --
def make_fused_kernel(TN, C, H, W, Wc):
    """Fused per-tile (TN samples): BN*attention affine, channel max, 7x7 conv
    (pad=3, no bias) as one batched MXU matmul + 7 static row-shift adds,
    sigmoid, and the final epilogue out = sigmoid(xw) * x * ys."""
    HW = H * W

    def fused_kernel(x_ref, a_ref, b_ref, wcat_ref, o_ref):
        x = x_ref[...]                                  # (TN, C, HW) lane-dense
        xw = x * a_ref[...] + b_ref[...]                # fused BN*wbn affine
        y = jnp.max(xw, axis=1)                         # (TN, HW) channel max

        # Horizontal conv for all 7 kernel rows and all TN samples in ONE
        # matmul against the fused Toeplitz operand wcat (W, Wc).
        y2 = y.reshape(TN * H, W)
        z = jnp.dot(y2, wcat_ref[...],
                    preferred_element_type=jnp.float32)  # (TN*H, Wc)
        z3 = z.reshape(TN, H, Wc)

        # Vertical part: static per-sample row shifts with zero boundary.
        zeros = jnp.zeros((TN, PAD, Wc), jnp.float32)
        zp = jnp.concatenate([zeros, z3, zeros], axis=1)  # (TN, H+2*PAD, Wc)
        acc = zp[:, 0:H, 0:W]                             # a = 0 contribution
        for a in range(1, K):                             # unrolled, static
            acc = acc + zp[:, a:a + H, a * W:a * W + W]

        ys = _sigmoid(acc).reshape(TN, 1, HW)             # stays in VMEM
        o_ref[...] = (_sigmoid(xw) * x * ys).astype(o_ref.dtype)

    return fused_kernel


# --------------------------------------------------------------- wrapper ---
def _conv_wcat(conv_w, W):
    """Fuse the 7 banded Toeplitz matrices (one per conv kernel row) into a
    single lane-dense (W, round_up(7*W, 128)) matmul operand."""
    kk = jnp.arange(W)[:, None]
    jj = jnp.arange(W)[None, :]
    d = kk - jj + PAD
    valid = (d >= 0) & (d < K)
    dcl = jnp.clip(d, 0, K - 1)
    mats = [jnp.where(valid, conv_w[a][dcl], 0.0) for a in range(K)]   # (W, W)
    wcat = jnp.concatenate(mats, axis=1)                               # (W, 7W)
    lane_pad = (-wcat.shape[1]) % 128
    return jnp.pad(wcat, ((0, 0), (0, lane_pad))).astype(jnp.float32)


def _vmem_limit_bytes():
    """Per-generation scoped-VMEM budget (75% of capacity, <= 100 MiB)."""
    try:
        cap = int(pltpu.get_tpu_info().vmem_capacity_bytes)
    except Exception:
        cap = 64 * 1024 * 1024          # conservative (v7x) fallback
    return min(cap * 3 // 4, 100 * 1024 * 1024)


def _pick_tn(N, C, HW, H, vmem_limit):
    """Samples per grid step in the fused pass: target TN*H >= 256 (fills the
    MXU M dim on v6e/v7x; >=128 already fills v5e), capped by VMEM."""
    want = max(1, 256 // max(H, 1))
    per_sample_bytes = C * HW * 4
    cap = max(1, (vmem_limit // 8) // max(per_sample_bytes, 1))
    want = min(want, cap, N)
    for tn in range(want, 0, -1):
        if N % tn == 0:
            return tn
    return 1


def cae_forward(x, gamma, beta, conv_w):
    N, C, H, W = x.shape
    HW = H * W
    f32 = jnp.float32
    x = x.astype(f32)
    x_flat = x.reshape(N, C, HW)                  # free view, lane-dense minor dim

    vmem_limit = _vmem_limit_bytes()

    # ---- pass 1: per-channel batch statistics (fused sum / sumsq) ----------
    nsplit = 2 if (N >= 2 and N % 2 == 0) else 1  # 2 TCs on v7x
    half = N // nsplit
    s1p, s2p = pl.pallas_call(
        stats_kernel,
        grid=(nsplit, half),
        in_specs=[pl.BlockSpec((1, C, HW), lambda s, n: (s * half + n, 0, 0))],
        out_specs=(pl.BlockSpec((1, C, 1), lambda s, n: (s, 0, 0)),
                   pl.BlockSpec((1, C, 1), lambda s, n: (s, 0, 0))),
        out_shape=(jax.ShapeDtypeStruct((nsplit, C, 1), f32),
                   jax.ShapeDtypeStruct((nsplit, C, 1), f32)),
        compiler_params=pltpu.CompilerParams(
            dimension_semantics=("parallel", "arbitrary"),
            vmem_limit_bytes=vmem_limit),
        cost_estimate=pl.CostEstimate(
            flops=3 * N * C * HW, transcendentals=0,
            bytes_accessed=4 * (N * C * HW + 2 * nsplit * C)),
    )(x_flat)
    s1 = jnp.sum(s1p[:, :, 0], axis=0)
    s2 = jnp.sum(s2p[:, :, 0], axis=0)

    # ---- tiny per-channel finalize (computed once, not per tile) -----------
    cnt = float(N * HW)
    mean = s1 / cnt
    var = jnp.maximum(s2 / cnt - mean * mean, 0.0)   # biased var, clamp >= 0
    inv_std = jax.lax.rsqrt(var + EPS)
    gamma = gamma.astype(f32)
    beta = beta.astype(f32)
    wbn = jnp.abs(gamma) / jnp.sum(jnp.abs(gamma))
    scale = gamma * inv_std
    A = (scale * wbn).reshape(C, 1)                  # xw = x * A + B
    B = ((beta - mean * scale) * wbn).reshape(C, 1)

    wcat = _conv_wcat(conv_w.astype(f32), W)
    Wc = wcat.shape[1]

    # ---- pass 2 (fused): affine + channel max + conv + sigmoid + epilogue --
    TN = _pick_tn(N, C, HW, H, vmem_limit)
    fused_kernel = make_fused_kernel(TN, C, H, W, Wc)
    out_flat = pl.pallas_call(
        fused_kernel,
        grid=(N // TN,),
        in_specs=[pl.BlockSpec((TN, C, HW), lambda n: (n, 0, 0)),
                  pl.BlockSpec((C, 1), lambda n: (0, 0)),
                  pl.BlockSpec((C, 1), lambda n: (0, 0)),
                  pl.BlockSpec((W, Wc), lambda n: (0, 0))],
        out_specs=pl.BlockSpec((TN, C, HW), lambda n: (n, 0, 0)),
        out_shape=jax.ShapeDtypeStruct((N, C, HW), f32),
        compiler_params=pltpu.CompilerParams(
            dimension_semantics=("parallel",),
            vmem_limit_bytes=vmem_limit),
        cost_estimate=pl.CostEstimate(
            flops=N * (8 * C * HW + 2 * H * W * Wc + K * HW),
            transcendentals=N * (C * HW + 2 * HW),
            bytes_accessed=4 * (2 * N * C * HW + W * Wc + 2 * C)),
    )(x_flat, A, B, wcat)

    return out_flat.reshape(N, C, H, W)


# -------------------------------------------------------------- reference --
def cae_reference(x, gamma, beta, conv_w):
    """Pure-JAX reference mirroring the PyTorch forward (training-mode BN)."""
    mean = jnp.mean(x, axis=(0, 2, 3), keepdims=True)
    var = jnp.mean((x - mean) ** 2, axis=(0, 2, 3), keepdims=True)  # biased
    g = gamma.reshape(1, -1, 1, 1)
    b = beta.reshape(1, -1, 1, 1)
    xbn = (x - mean) / jnp.sqrt(var + EPS) * g + b
    wbn = jnp.abs(g) / jnp.sum(jnp.abs(g))
    xw = xbn * wbn
    y = jnp.max(xw, axis=1, keepdims=True)
    yc = jax.lax.conv_general_dilated(
        y, conv_w.reshape(1, 1, K, K), (1, 1), [(PAD, PAD), (PAD, PAD)],
        dimension_numbers=("NCHW", "OIHW", "NCHW"))
    ys = _sigmoid(yc)
    return _sigmoid(xw) * x * ys


if __name__ == "__main__":
    key = jax.random.PRNGKey(0)
    kx, kg, kb, kw = jax.random.split(key, 4)
    N, C, H, W = 2, 4, 16, 16

    x = jax.random.normal(kx, (N, C, H, W), dtype=jnp.float32)
    gamma = jax.random.normal(kg, (C,), dtype=jnp.float32)          # bn2.weight
    beta = 0.1 * jax.random.normal(kb, (C,), dtype=jnp.float32)     # bn2.bias
    conv_w = jax.random.normal(kw, (K, K), dtype=jnp.float32) / K   # conv1.weight[0,0]

    out = jax.block_until_ready(cae_forward(x, gamma, beta, conv_w))

    ref = cae_reference(x, gamma, beta, conv_w)
    err = float(jnp.max(jnp.abs(out - ref)))
    assert jnp.allclose(out, ref, atol=2e-4, rtol=2e-4), f"max abs err {err}"
    print("KERNEL_OK")
</pallas_src>

<mosaic_0001>
module attributes {stable_mosaic.version = 11 : i64} {
  func.func @stats_kernel(%arg0: i32, %arg1: i32, %arg2: memref<1x4x256xf32, #tpu.memory_space<vmem>>, %arg3: memref<1x4x1xf32, #tpu.memory_space<vmem>>, %arg4: memref<1x4x1xf32, #tpu.memory_space<vmem>>) attributes {dimension_semantics = [#tpu.dimension_semantics<parallel>, #tpu.dimension_semantics<arbitrary>], iteration_bounds = array<i64: 2, 1>, scalar_prefetch = 0 : i64, scratch_operands = 0 : i64, tpu.core_type = #tpu.core_type<tc>, window_params = [{transform_indices = @transform_0, window_bounds = array<i64: 1, 4, 256>}, {transform_indices = @transform_1, window_bounds = array<i64: 1, 4, 1>}, {transform_indices = @transform_2, window_bounds = array<i64: 1, 4, 1>}]} {
    %c0_i32 = arith.constant 0 : i32
    %0 = arith.cmpi eq, %arg1, %c0_i32 : i32
    %1 = arith.extui %0 : i1 to i32
    %c0_i32_0 = arith.constant 0 : i32
    %2 = arith.cmpi ne, %1, %c0_i32_0 : i32
    scf.if %2 {
      %cst_16 = arith.constant 0.000000e+00 : f32
      %22 = vector.broadcast %cst_16 : f32 to vector<1x4x1xf32>
      %c0_17 = arith.constant 0 : index
      %c0_18 = arith.constant 0 : index
      %c0_19 = arith.constant 0 : index
      %23 = vector.load %arg3[%c0_17, %c0_18, %c0_19] : memref<1x4x1xf32, #tpu.memory_space<vmem>>, vector<1x4x1xf32>
      tpu.vector_store %arg3[%c0_17, %c0_18, %c0_19], %22 {strides = array<i32>} : memref<1x4x1xf32, #tpu.memory_space<vmem>>, vector<1x4x1xf32>,
      %cst_20 = arith.constant 0.000000e+00 : f32
      %24 = vector.broadcast %cst_20 : f32 to vector<1x4x1xf32>
      %c0_21 = arith.constant 0 : index
      %c0_22 = arith.constant 0 : index
      %c0_23 = arith.constant 0 : index
      %25 = vector.load %arg4[%c0_21, %c0_22, %c0_23] : memref<1x4x1xf32, #tpu.memory_space<vmem>>, vector<1x4x1xf32>
      tpu.vector_store %arg4[%c0_21, %c0_22, %c0_23], %24 {strides = array<i32>} : memref<1x4x1xf32, #tpu.memory_space<vmem>>, vector<1x4x1xf32>,
    } else {
    }
    %c0 = arith.constant 0 : index
    %c0_1 = arith.constant 0 : index
    %c0_2 = arith.constant 0 : index
    %3 = vector.load %arg2[%c0, %c0_1, %c0_2] : memref<1x4x256xf32, #tpu.memory_space<vmem>>, vector<1x4x256xf32>
    %4 = vector.shape_cast %3 : vector<1x4x256xf32> to vector<4x256xf32>
    %c0_3 = arith.constant 0 : index
    %c0_4 = arith.constant 0 : index
    %c0_5 = arith.constant 0 : index
    %5 = vector.load %arg3[%c0_3, %c0_4, %c0_5] : memref<1x4x1xf32, #tpu.memory_space<vmem>>, vector<1x4x1xf32>
    %6 = vector.shape_cast %5 : vector<1x4x1xf32> to vector<4x1xf32>
    %cst = arith.constant dense<0.000000e+00> : vector<4xf32>
    %7 = vector.multi_reduction <add>, %4, %cst [1] : vector<4x256xf32> to vector<4xf32>
    %8 = vector.shape_cast %7 : vector<4xf32> to vector<4x1xf32>
    %9 = arith.addf %6, %8 : vector<4x1xf32>
    %c0_6 = arith.constant 0 : index
    %c0_7 = arith.constant 0 : index
    %c0_8 = arith.constant 0 : index
    %10 = vector.load %arg3[%c0_6, %c0_7, %c0_8] : memref<1x4x1xf32, #tpu.memory_space<vmem>>, vector<1x4x1xf32>
    %11 = vector.shape_cast %10 : vector<1x4x1xf32> to vector<4x1xf32>
    %12 = vector.shape_cast %9 : vector<4x1xf32> to vector<1x4x1xf32>
    tpu.vector_store %arg3[%c0_6, %c0_7, %c0_8], %12 {strides = array<i32>} : memref<1x4x1xf32, #tpu.memory_space<vmem>>, vector<1x4x1xf32>,
    %c0_9 = arith.constant 0 : index
    %c0_10 = arith.constant 0 : index
    %c0_11 = arith.constant 0 : index
    %13 = vector.load %arg4[%c0_9, %c0_10, %c0_11] : memref<1x4x1xf32, #tpu.memory_space<vmem>>, vector<1x4x1xf32>
    %14 = vector.shape_cast %13 : vector<1x4x1xf32> to vector<4x1xf32>
    %15 = arith.mulf %4, %4 : vector<4x256xf32>
    %cst_12 = arith.constant dense<0.000000e+00> : vector<4xf32>
    %16 = vector.multi_reduction <add>, %15, %cst_12 [1] : vector<4x256xf32> to vector<4xf32>
    %17 = vector.shape_cast %16 : vector<4xf32> to vector<4x1xf32>
    %18 = arith.addf %14, %17 : vector<4x1xf32>
    %c0_13 = arith.constant 0 : index
    %c0_14 = arith.constant 0 : index
    %c0_15 = arith.constant 0 : index
    %19 = vector.load %arg4[%c0_13, %c0_14, %c0_15] : memref<1x4x1xf32, #tpu.memory_space<vmem>>, vector<1x4x1xf32>
    %20 = vector.shape_cast %19 : vector<1x4x1xf32> to vector<4x1xf32>
    %21 = vector.shape_cast %18 : vector<4x1xf32> to vector<1x4x1xf32>
    tpu.vector_store %arg4[%c0_13, %c0_14, %c0_15], %21 {strides = array<i32>} : memref<1x4x1xf32, #tpu.memory_space<vmem>>, vector<1x4x1xf32>,
    return
  }
  func.func @transform_0(%arg0: i32, %arg1: i32) -> (i32, i32, i32) {
    %c1_i32 = arith.constant 1 : i32
    %0 = arith.muli %arg0, %c1_i32 : i32
    %1 = arith.addi %0, %arg1 : i32
    %c0_i32 = arith.constant 0 : i32
    %c0_i32_0 = arith.constant 0 : i32
    %c0_i32_1 = arith.constant 0 : i32
    return %1, %c0_i32, %c0_i32_0 : i32, i32, i32
  }
  func.func @transform_1(%arg0: i32, %arg1: i32) -> (i32, i32, i32) {
    %c0_i32 = arith.constant 0 : i32
    %c0_i32_0 = arith.constant 0 : i32
    %c0_i32_1 = arith.constant 0 : i32
    return %arg0, %c0_i32, %c0_i32_0 : i32, i32, i32
  }
  func.func @transform_2(%arg0: i32, %arg1: i32) -> (i32, i32, i32) {
    %c0_i32 = arith.constant 0 : i32
    %c0_i32_0 = arith.constant 0 : i32
    %c0_i32_1 = arith.constant 0 : i32
    return %arg0, %c0_i32, %c0_i32_0 : i32, i32, i32
  }
}

</mosaic_0001>

<llo_original>
// kernel: tpu_custom_call.1
$region0: #{tpu_custom_call.1}
  #allocation0 [shape = 'u32[]', space=smem, size = 0x4, offset = 0x4, fixed_abs, tag = 'smem constant byte address 0x4 - core index']
  #allocation1 [shape = 'u32[72,128]{1,0:T(1,128)}', space=vmem, size = 0x9000, scoped, tag = 'internal scratch']
  %s0 = inlined_call_operand.hbm [shape: f32[2,4,256], index: 0, kind: input, shape index: {}]
  %s1 = inlined_call_operand.vmem [shape: f32[2,4,1], index: 1, kind: output, shape index: {0}]
  %s2 = inlined_call_operand.vmem [shape: f32[2,4,1], index: 2, kind: output, shape index: {1}]
  %3 = xla_tuple %s1, %s2
  %s4 = sld [smem:[#allocation0]]
  $region53: #{tpu_custom_call.1} parent=0
    _
  %s6 = ssub.s32 1, %s4
  %s7 = scalar_select 0, %s6, %s4
  $region1: #{tpu_custom_call.1} parent=0
    #allocation2 [shape = 'u8[8192]{0}', space=vmem, size = 0x2000, scoped, tag = 'input window, operand 0']
    #allocation3 [shape = 's32[2]{0}', space=sflag, size = 0x8, scoped, tag = 'scoped memory for tpu_custom_call.1']
    %8 = vsyncpa [#allocation3], 0
    %s9 = scalar_lea.sflag [#allocation3], 1
    %10 = vsyncpa %s9, 0
    loop: start=0, step=1, limit=4
    $region2: #{tpu_custom_call.1} parent=1 // loop_pre_header
      _
    $region3: #{tpu_custom_call.1} parent=1 // loop_header
      %s12 = sphi 0, %s16
      %p13 = scmp.ge.s32.totalorder %s12, 4
      %s19 = sphi 0, %s31
      %s20 = sphi 0, %s27
      %s21 = sphi 0, %s19
      %s22 = sphi 0, %s20
      %s23 = sphi 0, %s21
      %s24 = sphi 0, %s22
      %s36 = sphi 0, %s38
      %s39 = sphi 0, %s36
      %s40 = sphi 0, %s39
      %s56 = sphi 0, %s40
      %s62 = sphi 0, %s64
      %s65 = sphi 0, %s62
      %s66 = sphi 0, %s65
      %s82 = sphi 0, %s66
      %s88 = sphi 0, %s90
      %s91 = sphi 0, %s88
      %s92 = sphi 0, %s91
      %s108 = sphi 0, %s92
    $region4: #{tpu_custom_call.1} parent=1 // loop_header_branch
      %15 = sbr.rel (%p13) target = $region8
    $region5: #{tpu_custom_call.1} parent=1 // loop_body
      %s17 = ssub.s32 %s12, 1
      %s18 = ssub.s32 %s12, 2
      %s25 = sadd.s32 1, %s20
      %p26 = scmp.ge.s32.totalorder %s25, 1
      %s27 = scalar_select %p26, 0, %s25
      %s28 = sadd.s32 1, %s19
      %s29 = scalar_select %p26, %s28, %s19
      %p30 = scmp.ge.s32.totalorder %s29, 2
      %s31 = scalar_select %p30, 0, %s29
      %s32 = sadd.s32 %s19, %s20
      %s33 = sadd.s32 %s31, %s27
      %s34 = ssub.s32 %s32, %s33
      %p35 = scmp.eq.s32.totalorder %s34, 0
      %s37 = sadd.s32 %s36, 1
      %s38 = scalar_select %p35, %s36, %s37
      %p41 = pneg %p35
      %p42 = scmp.eq.s32.totalorder %s12, 1
      %p43 = por %p41, %p42
      %p44 = scmp.ne.s32.totalorder %s36, %s39
      %p45 = scmp.eq.s32.totalorder %s12, 0
      %p46 = por %p44, %p45
      %p47 = scmp.ne.s32.totalorder %s36, %s39
      %p48 = scmp.eq.s32.totalorder %s17, 1
      %p49 = por %p47, %p48
      %p50 = scmp.ne.s32.totalorder %s39, %s40
      %p51 = scmp.eq.s32.totalorder %s17, 0
      %p52 = por %p50, %p51
      %p53 = scmp.ne.s32.totalorder %s39, %s40
      %p54 = scmp.eq.s32.totalorder %s18, 1
      %p55 = por %p53, %p54
      %p57 = scmp.ne.s32.totalorder %s40, %s56
      %p58 = scmp.eq.s32.totalorder %s18, 0
      %p59 = por %p57, %p58
      %s60 = ssub.s32 %s19, %s31
      %p61 = scmp.eq.s32.totalorder %s60, 0
      %s63 = sadd.s32 %s62, 1
      %s64 = scalar_select %p61, %s62, %s63
      %p67 = pneg %p61
      %p68 = scmp.eq.s32.totalorder %s12, 1
      %p69 = por %p67, %p68
      %p70 = scmp.ne.s32.totalorder %s62, %s65
      %p71 = scmp.eq.s32.totalorder %s12, 0
      %p72 = por %p70, %p71
      %p73 = scmp.ne.s32.totalorder %s62, %s65
      %p74 = scmp.eq.s32.totalorder %s17, 1
      %p75 = por %p73, %p74
      %p76 = scmp.ne.s32.totalorder %s65, %s66
      %p77 = scmp.eq.s32.totalorder %s17, 0
      %p78 = por %p76, %p77
      %p79 = scmp.ne.s32.totalorder %s65, %s66
      %p80 = scmp.eq.s32.totalorder %s18, 1
      %p81 = por %p79, %p80
      %p83 = scmp.ne.s32.totalorder %s66, %s82
      %p84 = scmp.eq.s32.totalorder %s18, 0
      %p85 = por %p83, %p84
      %s86 = ssub.s32 %s19, %s31
      %p87 = scmp.eq.s32.totalorder %s86, 0
      %s89 = sadd.s32 %s88, 1
      %s90 = scalar_select %p87, %s88, %s89
      %p93 = pneg %p87
      %p94 = scmp.eq.s32.totalorder %s12, 1
      %p95 = por %p93, %p94
      %p96 = scmp.ne.s32.totalorder %s88, %s91
      %p97 = scmp.eq.s32.totalorder %s12, 0
      %p98 = por %p96, %p97
      %p99 = scmp.ne.s32.totalorder %s88, %s91
      %p100 = scmp.eq.s32.totalorder %s17, 1
      %p101 = por %p99, %p100
      %p102 = scmp.ne.s32.totalorder %s91, %s92
      %p103 = scmp.eq.s32.totalorder %s17, 0
      %p104 = por %p102, %p103
      %p105 = scmp.ne.s32.totalorder %s91, %s92
      %p106 = scmp.eq.s32.totalorder %s18, 1
      %p107 = por %p105, %p106
      %p109 = scmp.ne.s32.totalorder %s92, %s108
      %p110 = scmp.eq.s32.totalorder %s18, 0
      %p111 = por %p109, %p110
      %p112 = scmp.le.s32.totalorder 1, %s12
      %p113 = scmp.lt.s32.totalorder %s12, 3
      %p114 = pnand %p112, %p113
      %p115 = pneg %p114
      // Predicated region
      $region9: #{tpu_custom_call.1} parent=5 // pred_check
        _
      $region10: #{tpu_custom_call.1} parent=5 // pred_check_branch
        %117 = sbr.rel (%p114) target = $region12
      $region11: #{tpu_custom_call.1} parent=5 // pred_region
        %s118 = ssub.s32 %s12, 1
      $region12: #{tpu_custom_call.1} parent=5 // pred_fallthru
        _
      %p119 = scmp.lt.s32.totalorder %s12, 2
      // Predicated region
      $region13: #{tpu_custom_call.1} parent=5 // pred_check
        %p120 = pneg %p119
      $region14: #{tpu_custom_call.1} parent=5 // pred_check_branch
        %122 = sbr.rel (%p120) target = $region16
      $region15: #{tpu_custom_call.1} parent=5 // pred_region
        // Predicated region
        $region17: #{tpu_custom_call.1} parent=15 // pred_check
          %p123 = pneg %p46
        $region18: #{tpu_custom_call.1} parent=15 // pred_check_branch
          %125 = sbr.rel (%p123) target = $region20
        $region19: #{tpu_custom_call.1} parent=15 // pred_region
          %s126 = sand.u32 %s36, 1
          %s127 = scalar_lea.sflag [#allocation3], %s126
          %s128 = sand.u32 %s36, 1
          %s129 = smul.addr %s128, 8
          %s130 = scalar_lea.vmem [#allocation2], %s129
          %s131 = sadd.s32 %s19, %s20
          %133 = vsyncadd %s127, 0
          %s134 = smul.addr %s131, 2
          %s135 = smul.addr %s134, 4
          %s136 = scalar_lea.hbm %s0, %s135
          %s138 = sshll.u32 %s136, 4
          %s139 = int_to_ptr.hbm [resolvable:$true] %s138
          %s140 = sshll.u32 %s130, 4
          %s141 = int_to_ptr.vmem [resolvable:$true] %s140
          %143 = dma.hbm_to_vmem [thread:$0]  %s139, 128, %s141, %s127
        $region20: #{tpu_custom_call.1} parent=15 // pred_fallthru
          _
      $region16: #{tpu_custom_call.1} parent=5 // pred_fallthru
        _
      %p144 = scmp.le.s32.totalorder 1, %s12
      %p145 = scmp.lt.s32.totalorder %s12, 3
      %p146 = pnand %p144, %p145
      %p147 = pneg %p146
      // Predicated region
      $region21: #{tpu_custom_call.1} parent=5 // pred_check
        _
      $region22: #{tpu_custom_call.1} parent=5 // pred_check_branch
        %149 = sbr.rel (%p146) target = $region24
      $region23: #{tpu_custom_call.1} parent=5 // pred_region
        %s150 = ssub.s32 %s12, 1
        %s151 = sand.u32 %s39, 1
        %s152 = scalar_lea.sflag [#allocation3], %s151
        %s153 = sand.u32 %s39, 1
        %s154 = smul.addr %s153, 8
        %s155 = scalar_lea.vmem [#allocation2], %s154
        // Predicated region
        $region25: #{tpu_custom_call.1} parent=23 // pred_check
          %p156 = pneg %p52
        $region26: #{tpu_custom_call.1} parent=23 // pred_check_branch
          %158 = sbr.rel (%p156) target = $region28
        $region27: #{tpu_custom_call.1} parent=23 // pred_region
          %160 = dma.done %s152, 128
        $region28: #{tpu_custom_call.1} parent=23 // pred_fallthru
          _
        %s161 = sand.u32 %s39, 1
        %s162 = scalar_lea.sflag [#allocation3], %s161
        %s163 = sand.u32 %s39, 1
        %s164 = smul.addr %s163, 8
        %s165 = scalar_lea.vmem [#allocation2], %s164
        %p166 = pneg %p52
        %p167 = pneg %p49
        %p168 = pneg %p78
        %p169 = pneg %p75
        %p170 = scmp.lt.s32.totalorder %s21, 1
        %s171 = scalar_select %p170, %s21, 1
        %s172 = smul.addr %s171, 4
        %s173 = scalar_lea.vmem %s1, %s172
        %p174 = pneg %p104
        %p175 = pneg %p101
        %p176 = scmp.lt.s32.totalorder %s21, 1
        %s177 = scalar_select %p176, %s21, 1
        %s178 = smul.addr %s177, 4
        %s179 = scalar_lea.vmem %s2, %s178
        %s180 = sadd.s32 %s21, %s22
        %p181 = scmp.lt.s32.totalorder %s21, 1
        %s182 = scalar_select %p181, %s21, 1
        %s183 = smul.addr %s182, 4
        %s184 = scalar_lea.vmem %s1, %s183
        %p185 = scmp.lt.s32.totalorder %s21, 1
        %s186 = scalar_select %p185, %s21, 1
        %s187 = smul.addr %s186, 4
        %s188 = scalar_lea.vmem %s2, %s187
        %p189 = scmp.eq.s32.totalorder %s22, 0
        // Predicated region
        $region29: #{tpu_custom_call.1} parent=23 // pred_check
          %p190 = pneg %p189
        $region30: #{tpu_custom_call.1} parent=23 // pred_check_branch
          %192 = sbr.rel (%p190) target = $region32
        $region31: #{tpu_custom_call.1} parent=23 // pred_region
          %vm193 = vcmask 3072
          %194 = vst.msk [vmem:[%s184] sm:$0xf] %vm193, 0.0
          %195 = vst.msk [vmem:[%s188] sm:$0xf] %vm193, 0.0
        $region32: #{tpu_custom_call.1} parent=23 // pred_fallthru
          _
        %v196 = vld [vmem:[%s155] sm:$0xff]
        %v197 = vld [vmem:[%s184] sm:$0xf]
        %199 = vst [vmem:[#allocation1] ss:$2 sm:$0xff] %v196
        %v200 = vld.sshfl [vmem:[#allocation1] sm:$0xff pattern:$0x75316420]
        %v201 = vld.sshfl [vmem:[#allocation1 + $0x8] sm:$0xff pattern:$0x75316420]
        %vm204 = vcmask 1043456
        %v205 = vsel %vm204, %v200, 0.0
        %v206 = vsel %vm204, %v201, 0.0
        %v207 = vadd.f32 %v205, %v206
        %208 = vadd.xlane.f32.xlu0 %v207
        %v209 = vpop.xlane.xlu0 %208
        %v210 = vadd.f32 %v197, %v209
        %vm211 = vcmask 3072
        %212 = vst.msk [vmem:[%s184] sm:$0xf] %vm211, %v210
        %v213 = vld [vmem:[%s188] sm:$0xf]
        %v214 = vmul.f32 %v196, %v196
        %216 = vst [vmem:[#allocation1] ss:$2 sm:$0xff] %v214
        %v217 = vld.sshfl [vmem:[#allocation1] sm:$0xff pattern:$0x75316420]
        %v218 = vld.sshfl [vmem:[#allocation1 + $0x8] sm:$0xff pattern:$0x75316420]
        %v221 = vsel %vm204, %v217, 0.0
        %v222 = vsel %vm204, %v218, 0.0
        %v223 = vadd.f32 %v221, %v222
        %224 = vadd.xlane.f32.xlu0 %v223
        %v225 = vpop.xlane.xlu0 %224
        %v226 = vadd.f32 %v213, %v225
        %227 = vst.msk [vmem:[%s188] sm:$0xf] %vm211, %v226
        %p228 = scmp.lt.s32.totalorder %s21, 1
        %s229 = scalar_select %p228, %s21, 1
        %s230 = smul.addr %s229, 4
        %s231 = scalar_lea.vmem %s1, %s230
        %p232 = scmp.lt.s32.totalorder %s21, 1
        %s233 = scalar_select %p232, %s21, 1
        %s234 = smul.addr %s233, 4
        %s235 = scalar_lea.vmem %s2, %s234
        // Predicated region
        $region33: #{tpu_custom_call.1} parent=23 // pred_check
          %p236 = pneg %p75
        $region34: #{tpu_custom_call.1} parent=23 // pred_check_branch
          %238 = sbr.rel (%p236) target = $region36
        $region35: #{tpu_custom_call.1} parent=23 // pred_region
          _
        $region36: #{tpu_custom_call.1} parent=23 // pred_fallthru
          _
        // Predicated region
        $region37: #{tpu_custom_call.1} parent=23 // pred_check
          %p239 = pneg %p101
        $region38: #{tpu_custom_call.1} parent=23 // pred_check_branch
          %241 = sbr.rel (%p239) target = $region40
        $region39: #{tpu_custom_call.1} parent=23 // pred_region
          _
        $region40: #{tpu_custom_call.1} parent=23 // pred_fallthru
          _
      $region24: #{tpu_custom_call.1} parent=5 // pred_fallthru
        _
      %p242 = scmp.le.s32.totalorder 2, %s12
      // Predicated region
      $region41: #{tpu_custom_call.1} parent=5 // pred_check
        %p243 = pneg %p242
      $region42: #{tpu_custom_call.1} parent=5 // pred_check_branch
        %245 = sbr.rel (%p243) target = $region44
      $region43: #{tpu_custom_call.1} parent=5 // pred_region
        %s246 = ssub.s32 %s12, 2
        // Predicated region
        $region45: #{tpu_custom_call.1} parent=43 // pred_check
          %p247 = pneg %p81
        $region46: #{tpu_custom_call.1} parent=43 // pred_check_branch
          %249 = sbr.rel (%p247) target = $region48
        $region47: #{tpu_custom_call.1} parent=43 // pred_region
          %p250 = scmp.lt.s32.totalorder %s23, 1
          %s251 = scalar_select %p250, %s23, 1
          %s252 = smul.addr %s251, 4
          %s253 = scalar_lea.vmem %s1, %s252
        $region48: #{tpu_custom_call.1} parent=43 // pred_fallthru
          _
        // Predicated region
        $region49: #{tpu_custom_call.1} parent=43 // pred_check
          %p254 = pneg %p107
        $region50: #{tpu_custom_call.1} parent=43 // pred_check_branch
          %256 = sbr.rel (%p254) target = $region52
        $region51: #{tpu_custom_call.1} parent=43 // pred_region
          %p257 = scmp.lt.s32.totalorder %s23, 1
          %s258 = scalar_select %p257, %s23, 1
          %s259 = smul.addr %s258, 4
          %s260 = scalar_lea.vmem %s2, %s259
        $region52: #{tpu_custom_call.1} parent=43 // pred_fallthru
          _
      $region44: #{tpu_custom_call.1} parent=5 // pred_fallthru
        _
    $region6: #{tpu_custom_call.1} parent=1 // loop_footer
      %s16 = sadd.s32 1, %s12
    $region7: #{tpu_custom_call.1} parent=1 // loop_footer_branch
      %11 = sbr.rel target = $region3
    $region8: #{tpu_custom_call.1} parent=1 // loop_exit
      _
    %261 = vsyncpa [#allocation3], 1
    %s262 = scalar_lea.sflag [#allocation3], 1
    %263 = vsyncpa %s262, 1

</llo_original>
